<compile_context>
chip_gen: v7x
topology: tpu7x:2x2x1
jax: 0.10.0
libtpu: 0.0.40
codegen_flags: <defaults>
</compile_context>

<pallas_src>
import jax
import jax.numpy as jnp
from jax.experimental import pallas as pl
from jax.experimental.pallas import tpu as pltpu

KH = KW = 3  # 3x3 "same" conv in the synthetic backbone stem


def _round_up(n, m):
    return -(-n // m) * m


def our_model_kernel(p_ref, cw_ref, cb_ref, pool_ref, wf_ref, lb_ref, o_ref):
    # p_ref   : (B*HW, Kp)   im2col patches, contraction dim zero-padded to Kp
    # cw_ref  : (Kp, Cfp)    conv weight (zero rows / cols in the padding)
    # cb_ref  : (1, Cfp)     conv bias (zero in padded channels)
    # pool_ref: (B, B*HW)    block-"diagonal" 1/HW pooling matrix (GAP as matmul)
    # wf_ref  : (Cfp, NCp)   folded (v v^T) @ W_lin^T, zero-padded
    # lb_ref  : (1, NCp)     linear bias, zero-padded
    # o_ref   : (B, NCp)     lane-dense padded logits
    y = jnp.dot(p_ref[...], cw_ref[...],
                preferred_element_type=jnp.float32)            # conv as one matmul (MXU)
    y = jnp.maximum(y + cb_ref[...], 0.0)                      # bias + ReLU (VPU, hidden)
    feat = jnp.dot(pool_ref[...], y,
                   preferred_element_type=jnp.float32)         # GAP via MXU -> (B, Cfp)
    o_ref[...] = (jnp.dot(feat, wf_ref[...],
                          preferred_element_type=jnp.float32)  # eigenbasis + head, folded
                  + lb_ref[...])


def our_model_forward(x_nchw, params):
    conv_w, conv_b = params["conv_w"], params["conv_b"]   # (3,3,Cin,Cf), (Cf,)
    v = params["v"]                                       # (Cf, 10)  (SVD right vectors)
    lin_w, lin_b = params["lin_w"], params["lin_b"]       # (NC, Cf), (NC,)

    B, Cin, H, W = x_nchw.shape
    Cf = conv_w.shape[-1]
    NC = lin_w.shape[0]
    K = KH * KW * Cin
    HW = H * W
    BHW = B * HW

    # padded (TPU-friendly) dims
    Kp = _round_up(K, 8)         # sublane-aligned contraction dim
    Cfp = _round_up(Cf, 128)     # lane-dense feature dim
    NCp = _round_up(NC, 128)     # lane-dense output dim

    # ---- glue: NCHW -> NHWC, zero-pad for 'same' conv, im2col patches ----
    x = jnp.transpose(x_nchw, (0, 2, 3, 1)).astype(jnp.float32)
    x_pad = jnp.pad(x, ((0, 0), (1, 1), (1, 1), (0, 0)))
    patches = jnp.concatenate(
        [x_pad[:, dy:dy + H, dx:dx + W, :]
         for dy in range(KH) for dx in range(KW)],
        axis=-1).reshape(BHW, K)
    patches = jnp.pad(patches, ((0, 0), (0, Kp - K)))                 # (BHW, Kp)

    # ---- parameter setup (mirrors __init__: eigenbasis = v @ v.mT) ----
    cw = jnp.pad(conv_w.reshape(K, Cf).astype(jnp.float32),
                 ((0, Kp - K), (0, Cfp - Cf)))                        # (Kp, Cfp)
    cb = jnp.pad(conv_b.astype(jnp.float32), (0, Cfp - Cf)).reshape(1, Cfp)
    w_fold = (v @ v.T) @ lin_w.T                                      # (Cf, NC)
    wf = jnp.pad(w_fold.astype(jnp.float32),
                 ((0, Cfp - Cf), (0, NCp - NC)))                      # (Cfp, NCp)
    lb = jnp.pad(lin_b.astype(jnp.float32), (0, NCp - NC)).reshape(1, NCp)
    # global-avg-pool as a matmul: pool[b, b*HW:(b+1)*HW] = 1/HW
    pool = jnp.kron(jnp.eye(B, dtype=jnp.float32),
                    jnp.ones((1, HW), jnp.float32) / float(HW))       # (B, BHW)

    out_padded = pl.pallas_call(
        our_model_kernel,
        out_shape=jax.ShapeDtypeStruct((B, NCp), jnp.float32),
        grid=(1,),  # single step: whole batch at once (no per-batch grid overhead)
        in_specs=[
            pl.BlockSpec((BHW, Kp), lambda i: (0, 0)),
            pl.BlockSpec((Kp, Cfp), lambda i: (0, 0)),
            pl.BlockSpec((1, Cfp), lambda i: (0, 0)),
            pl.BlockSpec((B, BHW), lambda i: (0, 0)),
            pl.BlockSpec((Cfp, NCp), lambda i: (0, 0)),
            pl.BlockSpec((1, NCp), lambda i: (0, 0)),
        ],
        out_specs=pl.BlockSpec((B, NCp), lambda i: (0, 0)),
        compiler_params=pltpu.CompilerParams(
            dimension_semantics=("arbitrary",),
            vmem_limit_bytes=64 << 20),
    )(patches, cw, cb, pool, wf, lb)

    return out_padded[:, :NC]


if __name__ == "__main__":
    key = jax.random.PRNGKey(0)
    B, Cin, H, W = 2, 3, 16, 16      # small CIFAR-like input (NCHW)
    Cf, NC = 32, 10                  # feature dim, num classes

    ks = jax.random.split(key, 6)
    params = {
        "conv_w": jax.random.normal(ks[0], (KH, KW, Cin, Cf), jnp.float32) * 0.1,
        "conv_b": jax.random.normal(ks[1], (Cf,), jnp.float32) * 0.1,
        "v":      jax.random.normal(ks[2], (Cf, NC), jnp.float32) * 0.1,
        "lin_w":  jax.random.normal(ks[3], (NC, Cf), jnp.float32) * 0.1,
        "lin_b":  jax.random.normal(ks[4], (NC,), jnp.float32) * 0.1,
    }
    x = jax.random.normal(ks[5], (B, Cin, H, W), jnp.float32)

    out = jax.block_until_ready(our_model_forward(x, params))
    assert out.shape == (B, NC)

    # ---- pure-JAX reference of the same forward for a correctness check ----
    xn = jnp.transpose(x, (0, 2, 3, 1))
    xp = jnp.pad(xn, ((0, 0), (1, 1), (1, 1), (0, 0)))
    patches = jnp.concatenate(
        [xp[:, dy:dy + H, dx:dx + W, :] for dy in range(KH) for dx in range(KW)],
        axis=-1).reshape(B, H * W, -1)
    y = jnp.maximum(patches @ params["conv_w"].reshape(-1, Cf) + params["conv_b"], 0.0)
    feat = y.mean(axis=1)
    ref = feat @ (params["v"] @ params["v"].T) @ params["lin_w"].T + params["lin_b"]
    assert jnp.allclose(out, ref, atol=1e-3, rtol=1e-3)

    print("KERNEL_OK")
</pallas_src>

<mosaic_0001>
module attributes {stable_mosaic.version = 11 : i64} {
  func.func @our_model_kernel(%arg0: i32, %arg1: memref<512x32xf32, #tpu.memory_space<vmem>>, %arg2: memref<32x128xf32, #tpu.memory_space<vmem>>, %arg3: memref<1x128xf32, #tpu.memory_space<vmem>>, %arg4: memref<2x512xf32, #tpu.memory_space<vmem>>, %arg5: memref<128x128xf32, #tpu.memory_space<vmem>>, %arg6: memref<1x128xf32, #tpu.memory_space<vmem>>, %arg7: memref<2x128xf32, #tpu.memory_space<vmem>>) attributes {dimension_semantics = [#tpu.dimension_semantics<arbitrary>], iteration_bounds = array<i64: 1>, scalar_prefetch = 0 : i64, scratch_operands = 0 : i64, tpu.core_type = #tpu.core_type<tc>, window_params = [{pipeline_mode = #tpu.pipeline_mode<synchronous>, transform_indices = @transform_0, window_bounds = array<i64: 512, 32>}, {pipeline_mode = #tpu.pipeline_mode<synchronous>, transform_indices = @transform_1, window_bounds = array<i64: 32, 128>}, {pipeline_mode = #tpu.pipeline_mode<synchronous>, transform_indices = @transform_2, window_bounds = array<i64: 1, 128>}, {pipeline_mode = #tpu.pipeline_mode<synchronous>, transform_indices = @transform_3, window_bounds = array<i64: 2, 512>}, {pipeline_mode = #tpu.pipeline_mode<synchronous>, transform_indices = @transform_4, window_bounds = array<i64: 128, 128>}, {pipeline_mode = #tpu.pipeline_mode<synchronous>, transform_indices = @transform_5, window_bounds = array<i64: 1, 128>}, {pipeline_mode = #tpu.pipeline_mode<synchronous>, transform_indices = @transform_6, window_bounds = array<i64: 2, 128>}]} {
    %c0 = arith.constant 0 : index
    %c0_0 = arith.constant 0 : index
    %0 = vector.load %arg1[%c0, %c0_0] : memref<512x32xf32, #tpu.memory_space<vmem>>, vector<512x32xf32>
    %c0_1 = arith.constant 0 : index
    %c0_2 = arith.constant 0 : index
    %1 = vector.load %arg2[%c0_1, %c0_2] : memref<32x128xf32, #tpu.memory_space<vmem>>, vector<32x128xf32>
    %cst = arith.constant dense<0.000000e+00> : vector<512x128xf32>
    %2 = tpu.matmul %0, %1, %cst {dimension_numbers = #tpu.dot_dimension_numbers<[1], [0], [0], [1], [0, 0, 1, 1], [], []>} : vector<512x32xf32>, vector<32x128xf32>, vector<512x128xf32> -> vector<512x128xf32>
    %c0_3 = arith.constant 0 : index
    %c0_4 = arith.constant 0 : index
    %3 = vector.load %arg3[%c0_3, %c0_4] : memref<1x128xf32, #tpu.memory_space<vmem>>, vector<1x128xf32>
    %4 = vector.broadcast %3 : vector<1x128xf32> to vector<512x128xf32>
    %5 = arith.addf %2, %4 : vector<512x128xf32>
    %cst_5 = arith.constant 0.000000e+00 : f32
    %6 = vector.broadcast %cst_5 : f32 to vector<512x128xf32>
    %7 = arith.maximumf %5, %6 : vector<512x128xf32>
    %c0_6 = arith.constant 0 : index
    %c0_7 = arith.constant 0 : index
    %8 = vector.load %arg4[%c0_6, %c0_7] : memref<2x512xf32, #tpu.memory_space<vmem>>, vector<2x512xf32>
    %cst_8 = arith.constant dense<0.000000e+00> : vector<2x128xf32>
    %9 = tpu.matmul %8, %7, %cst_8 {dimension_numbers = #tpu.dot_dimension_numbers<[1], [0], [0], [1], [0, 0, 1, 1], [], []>} : vector<2x512xf32>, vector<512x128xf32>, vector<2x128xf32> -> vector<2x128xf32>
    %c0_9 = arith.constant 0 : index
    %c0_10 = arith.constant 0 : index
    %10 = vector.load %arg5[%c0_9, %c0_10] : memref<128x128xf32, #tpu.memory_space<vmem>>, vector<128x128xf32>
    %cst_11 = arith.constant dense<0.000000e+00> : vector<2x128xf32>
    %11 = tpu.matmul %9, %10, %cst_11 {dimension_numbers = #tpu.dot_dimension_numbers<[1], [0], [0], [1], [0, 0, 1, 1], [], []>} : vector<2x128xf32>, vector<128x128xf32>, vector<2x128xf32> -> vector<2x128xf32>
    %c0_12 = arith.constant 0 : index
    %c0_13 = arith.constant 0 : index
    %12 = vector.load %arg6[%c0_12, %c0_13] : memref<1x128xf32, #tpu.memory_space<vmem>>, vector<1x128xf32>
    %13 = vector.broadcast %12 : vector<1x128xf32> to vector<2x128xf32>
    %14 = arith.addf %11, %13 : vector<2x128xf32>
    %c0_14 = arith.constant 0 : index
    %c0_15 = arith.constant 0 : index
    %15 = vector.load %arg7[%c0_14, %c0_15] : memref<2x128xf32, #tpu.memory_space<vmem>>, vector<2x128xf32>
    tpu.vector_store %arg7[%c0_14, %c0_15], %14 {strides = array<i32>} : memref<2x128xf32, #tpu.memory_space<vmem>>, vector<2x128xf32>,
    return
  }
  func.func @transform_0(%arg0: i32) -> (i32, i32) {
    %c0_i32 = arith.constant 0 : i32
    %c0_i32_0 = arith.constant 0 : i32
    %c0_i32_1 = arith.constant 0 : i32
    return %c0_i32, %c0_i32_0 : i32, i32
  }
  func.func @transform_1(%arg0: i32) -> (i32, i32) {
    %c0_i32 = arith.constant 0 : i32
    %c0_i32_0 = arith.constant 0 : i32
    %c0_i32_1 = arith.constant 0 : i32
    return %c0_i32, %c0_i32_0 : i32, i32
  }
  func.func @transform_2(%arg0: i32) -> (i32, i32) {
    %c0_i32 = arith.constant 0 : i32
    %c0_i32_0 = arith.constant 0 : i32
    %c0_i32_1 = arith.constant 0 : i32
    return %c0_i32, %c0_i32_0 : i32, i32
  }
  func.func @transform_3(%arg0: i32) -> (i32, i32) {
    %c0_i32 = arith.constant 0 : i32
    %c0_i32_0 = arith.constant 0 : i32
    %c0_i32_1 = arith.constant 0 : i32
    return %c0_i32, %c0_i32_0 : i32, i32
  }
  func.func @transform_4(%arg0: i32) -> (i32, i32) {
    %c0_i32 = arith.constant 0 : i32
    %c0_i32_0 = arith.constant 0 : i32
    %c0_i32_1 = arith.constant 0 : i32
    return %c0_i32, %c0_i32_0 : i32, i32
  }
  func.func @transform_5(%arg0: i32) -> (i32, i32) {
    %c0_i32 = arith.constant 0 : i32
    %c0_i32_0 = arith.constant 0 : i32
    %c0_i32_1 = arith.constant 0 : i32
    return %c0_i32, %c0_i32_0 : i32, i32
  }
  func.func @transform_6(%arg0: i32) -> (i32, i32) {
    %c0_i32 = arith.constant 0 : i32
    %c0_i32_0 = arith.constant 0 : i32
    %c0_i32_1 = arith.constant 0 : i32
    return %c0_i32, %c0_i32_0 : i32, i32
  }
}

</mosaic_0001>

<llo_original>
// kernel: tpu_custom_call.1
$region0: #{tpu_custom_call.1}
  #allocation0 [shape = 'u32[]', space=smem, size = 0x4, offset = 0x4, fixed_abs, tag = 'smem constant byte address 0x4 - core index']
  #allocation1 [shape = 'u32[144,128]{1,0:T(1,128)}', space=vmem, size = 0x12000, scoped, tag = 'internal scratch']
  %s0 = inlined_call_operand.hbm [shape: f32[512,32], index: 0, kind: input, shape index: {}]
  %s1 = inlined_call_operand.hbm [shape: f32[32,128], index: 1, kind: input, shape index: {}]
  %s2 = inlined_call_operand.hbm [shape: f32[1,128], index: 2, kind: input, shape index: {}]
  %s3 = inlined_call_operand.hbm [shape: f32[2,512], index: 3, kind: input, shape index: {}]
  %s4 = inlined_call_operand.hbm [shape: f32[128,128], index: 4, kind: input, shape index: {}]
  %s5 = inlined_call_operand.hbm [shape: f32[1,128], index: 5, kind: input, shape index: {}]
  %s6 = inlined_call_operand.hbm [shape: f32[2,128], index: 6, kind: output, shape index: {}]
  %s7 = sld [smem:[#allocation0]]
  $region58: #{tpu_custom_call.1} parent=0
    _
  %s9 = ssub.s32 1, %s7
  %s10 = scalar_select 0, %s9, %s7
  $region1: #{tpu_custom_call.1} parent=0
    #allocation2 [shape = 'u8[262144]{0}', space=vmem, size = 0x40000, scoped, tag = 'input window, operand 0, single buffered']
    #allocation3 [shape = 's32[1]{0}', space=sflag, size = 0x4, scoped, tag = 'scoped memory for tpu_custom_call.1']
    #allocation4 [shape = 's32[1]{0}', space=sflag, size = 0x4, scoped, tag = 'scoped memory for tpu_custom_call.1']
    #allocation5 [shape = 'u8[16384]{0}', space=vmem, size = 0x4000, scoped, tag = 'input window, operand 1, single buffered']
    #allocation6 [shape = 's32[1]{0}', space=sflag, size = 0x4, scoped, tag = 'scoped memory for tpu_custom_call.1']
    #allocation7 [shape = 'u8[512]{0}', space=vmem, size = 0x400, scoped, tag = 'input window, operand 2, single buffered']
    #allocation8 [shape = 'u8[4096]{0}', space=vmem, size = 0x1000, scoped, tag = 'input window, operand 3, single buffered']
    #allocation9 [shape = 's32[1]{0}', space=sflag, size = 0x4, scoped, tag = 'scoped memory for tpu_custom_call.1']
    #allocation10 [shape = 'u8[65536]{0}', space=vmem, size = 0x10000, scoped, tag = 'input window, operand 4, single buffered']
    #allocation11 [shape = 'u8[512]{0}', space=vmem, size = 0x400, scoped, tag = 'input window, operand 5, single buffered']
    #allocation12 [shape = 's32[1]{0}', space=sflag, size = 0x4, scoped, tag = 'scoped memory for tpu_custom_call.1']
    #allocation13 [shape = 'u8[1024]{0}', space=vmem, size = 0x400, scoped, tag = 'output window, operand 0, single buffered']
    %11 = vsyncpa [#allocation3], 0
    %12 = vsyncpa [#allocation6], 0
    %13 = vsyncpa [#allocation9], 0
    %14 = vsyncpa [#allocation12], 0
    %15 = vsyncpa [#allocation4], 0
    // Predicated region
    $region2: #{tpu_custom_call.1} parent=1 // pred_check
      _
    $region3: #{tpu_custom_call.1} parent=1 // pred_check_branch
      %17 = sbr.rel (0) target = $region5
    $region4: #{tpu_custom_call.1} parent=1 // pred_region
      %s19 = ssub.s32 8192, 8192
      %20 = vsyncadd [#allocation3], %s19
      %s21 = sshll.u32 [#allocation2], 4
      %s22 = int_to_ptr.vmem [resolvable:$true] %s21
      %27 = dma.hbm_to_vmem [thread:$0]  %s0, 8192, %s22, [#allocation3], 128, 128, 8
    $region5: #{tpu_custom_call.1} parent=1 // pred_fallthru
      _
    // Predicated region
    $region6: #{tpu_custom_call.1} parent=1 // pred_check
      _
    $region7: #{tpu_custom_call.1} parent=1 // pred_check_branch
      %29 = sbr.rel (0) target = $region9
    $region8: #{tpu_custom_call.1} parent=1 // pred_region
      %s31 = ssub.s32 512, 512
      %32 = vsyncadd [#allocation6], %s31
      %s33 = sshll.u32 [#allocation5], 4
      %s34 = int_to_ptr.vmem [resolvable:$true] %s33
      %39 = dma.hbm_to_vmem [thread:$0]  %s1, 512, %s34, [#allocation6], 128, 128, 8
    $region9: #{tpu_custom_call.1} parent=1 // pred_fallthru
      _
    // Predicated region
    $region10: #{tpu_custom_call.1} parent=1 // pred_check
      _
    $region11: #{tpu_custom_call.1} parent=1 // pred_check_branch
      %41 = sbr.rel (0) target = $region13
    $region12: #{tpu_custom_call.1} parent=1 // pred_region
      %s43 = ssub.s32 16, 16
      %44 = vsyncadd [#allocation6], %s43
      %s46 = sshll.u32 [#allocation7], 4
      %s47 = int_to_ptr.vmem [resolvable:$true] %s46
      %49 = dma.hbm_to_vmem [thread:$0]  %s2, 16, %s47, [#allocation6]
    $region13: #{tpu_custom_call.1} parent=1 // pred_fallthru
      _
    // Predicated region
    $region14: #{tpu_custom_call.1} parent=1 // pred_check
      _
    $region15: #{tpu_custom_call.1} parent=1 // pred_check_branch
      %51 = sbr.rel (0) target = $region17
    $region16: #{tpu_custom_call.1} parent=1 // pred_region
      %s53 = ssub.s32 128, 128
      %54 = vsyncadd [#allocation9], %s53
      %s56 = sshll.u32 [#allocation8], 4
      %s57 = int_to_ptr.vmem [resolvable:$true] %s56
      %59 = dma.hbm_to_vmem [thread:$0]  %s3, 128, %s57, [#allocation9]
    $region17: #{tpu_custom_call.1} parent=1 // pred_fallthru
      _
    // Predicated region
    $region18: #{tpu_custom_call.1} parent=1 // pred_check
      _
    $region19: #{tpu_custom_call.1} parent=1 // pred_check_branch
      %61 = sbr.rel (0) target = $region21
    $region20: #{tpu_custom_call.1} parent=1 // pred_region
      %s63 = ssub.s32 2048, 2048
      %64 = vsyncadd [#allocation9], %s63
      %s65 = sshll.u32 [#allocation10], 4
      %s66 = int_to_ptr.vmem [resolvable:$true] %s65
      %71 = dma.hbm_to_vmem [thread:$0]  %s4, 2048, %s66, [#allocation9], 128, 128, 8
    $region21: #{tpu_custom_call.1} parent=1 // pred_fallthru
      _
    // Predicated region
    $region22: #{tpu_custom_call.1} parent=1 // pred_check
      _
    $region23: #{tpu_custom_call.1} parent=1 // pred_check_branch
      %73 = sbr.rel (0) target = $region25
    $region24: #{tpu_custom_call.1} parent=1 // pred_region
      %s75 = ssub.s32 16, 16
      %76 = vsyncadd [#allocation12], %s75
      %s78 = sshll.u32 [#allocation11], 4
      %s79 = int_to_ptr.vmem [resolvable:$true] %s78
      %81 = dma.hbm_to_vmem [thread:$0]  %s5, 16, %s79, [#allocation12]
    $region25: #{tpu_custom_call.1} parent=1 // pred_fallthru
      _
    // Predicated region
    $region26: #{tpu_custom_call.1} parent=1 // pred_check
      _
    $region27: #{tpu_custom_call.1} parent=1 // pred_check_branch
      %83 = sbr.rel (0) target = $region29
    $region28: #{tpu_custom_call.1} parent=1 // pred_region
      %84 = dma.done [#allocation3], 8192
    $region29: #{tpu_custom_call.1} parent=1 // pred_fallthru
      _
    // Predicated region
    $region30: #{tpu_custom_call.1} parent=1 // pred_check
      _
    $region31: #{tpu_custom_call.1} parent=1 // pred_check_branch
      %86 = sbr.rel (0) target = $region33
    $region32: #{tpu_custom_call.1} parent=1 // pred_region
      %87 = dma.done [#allocation6], 512
    $region33: #{tpu_custom_call.1} parent=1 // pred_fallthru
      _
    // Predicated region
    $region34: #{tpu_custom_call.1} parent=1 // pred_check
      _
    $region35: #{tpu_custom_call.1} parent=1 // pred_check_branch
      %89 = sbr.rel (0) target = $region37
    $region36: #{tpu_custom_call.1} parent=1 // pred_region
      %90 = dma.done [#allocation6], 16
    $region37: #{tpu_custom_call.1} parent=1 // pred_fallthru
      _
    // Predicated region
    $region38: #{tpu_custom_call.1} parent=1 // pred_check
      _
    $region39: #{tpu_custom_call.1} parent=1 // pred_check_branch
      %92 = sbr.rel (0) target = $region41
    $region40: #{tpu_custom_call.1} parent=1 // pred_region
      %93 = dma.done [#allocation9], 128
    $region41: #{tpu_custom_call.1} parent=1 // pred_fallthru
      _
    // Predicated region
    $region42: #{tpu_custom_call.1} parent=1 // pred_check
      _
    $region43: #{tpu_custom_call.1} parent=1 // pred_check_branch
      %95 = sbr.rel (0) target = $region45
    $region44: #{tpu_custom_call.1} parent=1 // pred_region
      %96 = dma.done [#allocation9], 2048
    $region45: #{tpu_custom_call.1} parent=1 // pred_fallthru
      _
    // Predicated region
    $region46: #{tpu_custom_call.1} parent=1 // pred_check
      _
    $region47: #{tpu_custom_call.1} parent=1 // pred_check_branch
      %98 = sbr.rel (0) target = $region49
    $region48: #{tpu_custom_call.1} parent=1 // pred_region
      %99 = dma.done [#allocation12], 16
    $region49: #{tpu_custom_call.1} parent=1 // pred_fallthru
      _
    %v100 = vld [vmem:[#allocation2] sm:$0xff]
    %v101 = vld [vmem:[#allocation2 + $0x8] sm:$0xff]
    %v102 = vld [vmem:[#allocation2 + $0x10] sm:$0xff]
    %v103 = vld [vmem:[#allocation2 + $0x18] sm:$0xff]
    %v104 = vld [vmem:[#allocation2 + $0x20] sm:$0xff]
    %v105 = vld [vmem:[#allocation2 + $0x28] sm:$0xff]
    %v106 = vld [vmem:[#allocation2 + $0x30] sm:$0xff]
    %v107 = vld [vmem:[#allocation2 + $0x38] sm:$0xff]
    %v108 = vld [vmem:[#allocation2 + $0x40] sm:$0xff]
    %v109 = vld [vmem:[#allocation2 + $0x48] sm:$0xff]
    %v110 = vld [vmem:[#allocation2 + $0x50] sm:$0xff]
    %v111 = vld [vmem:[#allocation2 + $0x58] sm:$0xff]
    %v112 = vld [vmem:[#allocation2 + $0x60] sm:$0xff]
    %v113 = vld [vmem:[#allocation2 + $0x68] sm:$0xff]
    %v114 = vld [vmem:[#allocation2 + $0x70] sm:$0xff]
    %v115 = vld [vmem:[#allocation2 + $0x78] sm:$0xff]
    %v116 = vld [vmem:[#allocation2 + $0x80] sm:$0xff]
    %v117 = vld [vmem:[#allocation2 + $0x88] sm:$0xff]
    %v118 = vld [vmem:[#allocation2 + $0x90] sm:$0xff]
    %v119 = vld [vmem:[#allocation2 + $0x98] sm:$0xff]
    %v120 = vld [vmem:[#allocation2 + $0xa0] sm:$0xff]
    %v121 = vld [vmem:[#allocation2 + $0xa8] sm:$0xff]
    %v122 = vld [vmem:[#allocation2 + $0xb0] sm:$0xff]
    %v123 = vld [vmem:[#allocation2 + $0xb8] sm:$0xff]
    %v124 = vld [vmem:[#allocation2 + $0xc0] sm:$0xff]
    %v125 = vld [vmem:[#allocation2 + $0xc8] sm:$0xff]
    %v126 = vld [vmem:[#allocation2 + $0xd0] sm:$0xff]
    %v127 = vld [vmem:[#allocation2 + $0xd8] sm:$0xff]
    %v128 = vld [vmem:[#allocation2 + $0xe0] sm:$0xff]
    %v129 = vld [vmem:[#allocation2 + $0xe8] sm:$0xff]
    %v130 = vld [vmem:[#allocation2 + $0xf0] sm:$0xff]
    %v131 = vld [vmem:[#allocation2 + $0xf8] sm:$0xff]
    %v132 = vld [vmem:[#allocation2 + $0x100] sm:$0xff]
    %v133 = vld [vmem:[#allocation2 + $0x108] sm:$0xff]
    %v134 = vld [vmem:[#allocation2 + $0x110] sm:$0xff]
    %v135 = vld [vmem:[#allocation2 + $0x118] sm:$0xff]
    %v136 = vld [vmem:[#allocation2 + $0x120] sm:$0xff]
    %v137 = vld [vmem:[#allocation2 + $0x128] sm:$0xff]
    %v138 = vld [vmem:[#allocation2 + $0x130] sm:$0xff]
    %v139 = vld [vmem:[#allocation2 + $0x138] sm:$0xff]
    %v140 = vld [vmem:[#allocation2 + $0x140] sm:$0xff]
    %v141 = vld [vmem:[#allocation2 + $0x148] sm:$0xff]
    %v142 = vld [vmem:[#allocation2 + $0x150] sm:$0xff]
    %v143 = vld [vmem:[#allocation2 + $0x158] sm:$0xff]
    %v144 = vld [vmem:[#allocation2 + $0x160] sm:$0xff]
    %v145 = vld [vmem:[#allocation2 + $0x168] sm:$0xff]
    %v146 = vld [vmem:[#allocation2 + $0x170] sm:$0xff]
    %v147 = vld [vmem:[#allocation2 + $0x178] sm:$0xff]
    %v148 = vld [vmem:[#allocation2 + $0x180] sm:$0xff]
    %v149 = vld [vmem:[#allocation2 + $0x188] sm:$0xff]
    %v150 = vld [vmem:[#allocation2 + $0x190] sm:$0xff]
    %v151 = vld [vmem:[#allocation2 + $0x198] sm:$0xff]
    %v152 = vld [vmem:[#allocation2 + $0x1a0] sm:$0xff]
    %v153 = vld [vmem:[#allocation2 + $0x1a8] sm:$0xff]
    %v154 = vld [vmem:[#allocation2 + $0x1b0] sm:$0xff]
    %v155 = vld [vmem:[#allocation2 + $0x1b8] sm:$0xff]
    %v156 = vld [vmem:[#allocation2 + $0x1c0] sm:$0xff]
    %v157 = vld [vmem:[#allocation2 + $0x1c8] sm:$0xff]
    %v158 = vld [vmem:[#allocation2 + $0x1d0] sm:$0xff]
    %v159 = vld [vmem:[#allocation2 + $0x1d8] sm:$0xff]
    %v160 = vld [vmem:[#allocation2 + $0x1e0] sm:$0xff]
    %v161 = vld [vmem:[#allocation2 + $0x1e8] sm:$0xff]
    %v162 = vld [vmem:[#allocation2 + $0x1f0] sm:$0xff]
    %v163 = vld [vmem:[#allocation2 + $0x1f8] sm:$0xff]
    %v164 = vld [vmem:[#allocation5] sm:$0xff]
    %v165 = vld [vmem:[#allocation5 + $0x8] sm:$0xff]
    %v166 = vld [vmem:[#allocation5 + $0x10] sm:$0xff]
    %v167 = vld [vmem:[#allocation5 + $0x18] sm:$0xff]
    %v168 = vld [vmem:[#allocation7] sm:$0x1]
    %v170 = vlaneseq
    %v171 = vshrl.u32 %v170, 7
    %v172 = vsub.s32 0, %v171
    %v173 = vrot.slane %v168, %v172
    %vm175 = vcmask 261120
    %v177 = vsel %vm175, %v100, 0
    %v180 = vsel %vm175, %v101, 0
    %v183 = vsel %vm175, %v102, 0
    %v186 = vsel %vm175, %v103, 0
    %v189 = vsel %vm175, %v104, 0
    %v192 = vsel %vm175, %v105, 0
    %v195 = vsel %vm175, %v106, 0
    %v198 = vsel %vm175, %v107, 0
    %v201 = vsel %vm175, %v108, 0
    %v204 = vsel %vm175, %v109, 0
    %v207 = vsel %vm175, %v110, 0
    %v210 = vsel %vm175, %v111, 0
    %v213 = vsel %vm175, %v112, 0
    %v216 = vsel %vm175, %v113, 0
    %v219 = vsel %vm175, %v114, 0
    %v222 = vsel %vm175, %v115, 0
    %v225 = vsel %vm175, %v116, 0
    %v228 = vsel %vm175, %v117, 0
    %v231 = vsel %vm175, %v118, 0
    %v234 = vsel %vm175, %v119, 0
    %v237 = vsel %vm175, %v120, 0
    %v240 = vsel %vm175, %v121, 0
    %v243 = vsel %vm175, %v122, 0
    %v246 = vsel %vm175, %v123, 0
    %v249 = vsel %vm175, %v124, 0
    %v252 = vsel %vm175, %v125, 0
    %v255 = vsel %vm175, %v126, 0
    %v258 = vsel %vm175, %v127, 0
    %v261 = vsel %vm175, %v128, 0
    %v264 = vsel %vm175, %v129, 0
    %v267 = vsel %vm175, %v130, 0
    %v270 = vsel %vm175, %v131, 0
    %v273 = vsel %vm175, %v132, 0
    %v276 = vsel %vm175, %v133, 0
    %v279 = vsel %vm175, %v134, 0
    %v282 = vsel %vm175, %v135, 0
    %v285 = vsel %vm175, %v136, 0
    %v288 = vsel %vm175, %v137, 0
    %v291 = vsel %vm175, %v138, 0
    %v294 = vsel %vm175, %v139, 0
    %v297 = vsel %vm175, %v140, 0
    %v300 = vsel %vm175, %v141, 0
    %v303 = vsel %vm175, %v142, 0
    %v306 = vsel %vm175, %v143, 0
    %v309 = vsel %vm175, %v144, 0
    %v312 = vsel %vm175, %v145, 0
    %v315 = vsel %vm175, %v146, 0
    %v318 = vsel %vm175, %v147, 0
    %v321 = vsel %vm175, %v148, 0
    %v324 = vsel %vm175, %v149, 0
    %v327 = vsel %vm175, %v150, 0
    %v330 = vsel %vm175, %v151, 0
    %v333 = vsel %vm175, %v152, 0
    %v336 = vsel %vm175, %v153, 0
    %v339 = vsel %vm175, %v154, 0
    %v342 = vsel %vm175, %v155, 0
    %v345 = vsel %vm175, %v156, 0
    %v348 = vsel %vm175, %v157, 0
    %v351 = vsel %vm175, %v158, 0
    %v354 = vsel %vm175, %v159, 0
    %v357 = vsel %vm175, %v160, 0
    %v360 = vsel %vm175, %v161, 0
    %v363 = vsel %vm175, %v162, 0
    %v366 = vsel %vm175, %v163, 0
    %368 = vmatprep.subr.mxu0 0.0
    %369 = vmatpush1.msra.mxu0 %v164
    %370 = vmatprep.subr.mxu0 0.0
    %371 = vmatpush1.msra.mxu0 %v165
    %372 = vmatprep.subr.mxu0 0.0
    %373 = vmatpush1.msra.mxu0 %v166
    %374 = vmatprep.subr.mxu0 0.0
    %375 = vmatpush1.msra.mxu0 %v167
    %376 = vmatprep.subr.mxu0 0.0
    %377 = vmatpush1.msra.mxu0 0.0
    %378 = vmatprep.subr.mxu0 0.0
    %379 = vmatpush1.msra.mxu0 0.0
    %380 = vmatprep.subr.mxu0 0.0
    %381 = vmatpush1.msra.mxu0 0.0
    %382 = vmatprep.subr.mxu0 0.0
    %383 = vmatpush1.msra.mxu0 0.0
    %384 = vmatprep.subr.mxu0 0.0
    %385 = vmatpush1.msra.mxu0 0.0
    %386 = vmatprep.subr.mxu0 0.0
    %387 = vmatpush1.msra.mxu0 0.0
    %388 = vmatprep.subr.mxu0 0.0
    %389 = vmatpush1.msra.mxu0 0.0
    %390 = vmatprep.subr.mxu0 0.0
    %391 = vmatpush1.msra.mxu0 0.0
    %392 = vmatprep.subr.mxu0 0.0
    %393 = vmatpush1.msra.mxu0 0.0
    %394 = vmatprep.subr.mxu0 0.0
    %395 = vmatpush1.msra.mxu0 0.0
    %396 = vmatprep.subr.mxu0 0.0
    %397 = vmatpush1.msra.mxu0 0.0
    %398 = vmatprep.subr.mxu0 0.0
    %399 = vmatpush1.msra.mxu0 0.0
    %400 = vmatprep.subr.mxu0 0.0
    %401 = vmatpush1.msra.mxu0 0.0
    %402 = vmatprep.subr.mxu0 0.0
    %403 = vmatpush1.msra.mxu0 0.0
    %404 = vmatprep.subr.mxu0 0.0
    %405 = vmatpush1.msra.mxu0 0.0
    %406 = vmatprep.subr.mxu0 0.0
    %407 = vmatpush1.msra.mxu0 0.0
    %408 = vmatprep.subr.mxu0 0.0
    %409 = vmatpush1.msra.mxu0 0.0
    %410 = vmatprep.subr.mxu0 0.0
    %411 = vmatpush1.msra.mxu0 0.0
    %412 = vmatprep.subr.mxu0 0.0
    %413 = vmatpush1.msra.mxu0 0.0
    %414 = vmatprep.subr.mxu0 0.0
    %415 = vmatpush1.msra.mxu0 0.0
    %416 = vmatprep.subr.mxu0 0.0
    %417 = vmatpush1.msra.mxu0 0.0
    %418 = vmatprep.subr.mxu0 0.0
    %419 = vmatpush1.msra.mxu0 0.0
    %420 = vmatprep.subr.mxu0 0.0
    %421 = vmatpush1.msra.mxu0 0.0
    %422 = vmatprep.subr.mxu0 0.0
    %423 = vmatpush1.msra.mxu0 0.0
    %424 = vmatprep.subr.mxu0 0.0
    %425 = vmatpush1.msra.mxu0 0.0
    %426 = vmatprep.subr.mxu0 0.0
    %427 = vmatpush1.msra.mxu0 0.0
    %428 = vmatprep.subr.mxu0 0.0
    %429 = vmatpush1.msra.mxu0 0.0
    %430 = vmatprep.subr.mxu0 0.0
    %431 = vmatpush1.msra.mxu0 0.0
    %432 = vmatprep.mubr.f32.mxu0 0.0
    %433 = vmatmul.mubr.f32.gmra.mrb[0].mxu0 %v177
    %v434 = vpop.f32.mrb[0].mxu0
    %v435 = vadd.f32 %v173, %v434
    %v436 = vpop.f32.mrb[0].mxu0
    %437 = vmatprep.mubr.f32.mxu0 0.0
    %438 = vmatmul.mubr.f32.gmra.mrb[0].mxu0 %v180
    %v439 = vpop.f32.mrb[0].mxu0
    %v440 = vadd.f32 %v173, %v439
    %v441 = vpop.f32.mrb[0].mxu0
    %442 = vmatprep.mubr.f32.mxu0 0.0
    %443 = vmatmul.mubr.f32.gmra.mrb[0].mxu0 %v183
    %v444 = vpop.f32.mrb[0].mxu0
    %v445 = vadd.f32 %v173, %v444
    %v446 = vpop.f32.mrb[0].mxu0
    %447 = vmatprep.mubr.f32.mxu0 0.0
    %448 = vmatmul.mubr.f32.gmra.mrb[0].mxu0 %v186
    %v449 = vpop.f32.mrb[0].mxu0
    %v450 = vadd.f32 %v173, %v449
    %v451 = vpop.f32.mrb[0].mxu0
    %452 = vmatprep.mubr.f32.mxu0 0.0
    %453 = vmatmul.mubr.f32.gmra.mrb[0].mxu0 %v189
    %v454 = vpop.f32.mrb[0].mxu0
    %v455 = vadd.f32 %v173, %v454
    %v456 = vpop.f32.mrb[0].mxu0
    %457 = vmatprep.mubr.f32.mxu0 0.0
    %458 = vmatmul.mubr.f32.gmra.mrb[0].mxu0 %v192
    %v459 = vpop.f32.mrb[0].mxu0
    %v460 = vadd.f32 %v173, %v459
    %v461 = vpop.f32.mrb[0].mxu0
    %462 = vmatprep.mubr.f32.mxu0 0.0
    %463 = vmatmul.mubr.f32.gmra.mrb[0].mxu0 %v195
    %v464 = vpop.f32.mrb[0].mxu0
    %v465 = vadd.f32 %v173, %v464
    %v466 = vpop.f32.mrb[0].mxu0
    %467 = vmatprep.mubr.f32.mxu0 0.0
    %468 = vmatmul.mubr.f32.gmra.mrb[0].mxu0 %v198
    %v469 = vpop.f32.mrb[0].mxu0
    %v470 = vadd.f32 %v173, %v469
    %v471 = vpop.f32.mrb[0].mxu0
    %472 = vmatprep.mubr.f32.mxu0 0.0
    %473 = vmatmul.mubr.f32.gmra.mrb[0].mxu0 %v201
    %v474 = vpop.f32.mrb[0].mxu0
    %v475 = vadd.f32 %v173, %v474
    %v476 = vpop.f32.mrb[0].mxu0
    %477 = vmatprep.mubr.f32.mxu0 0.0
    %478 = vmatmul.mubr.f32.gmra.mrb[0].mxu0 %v204
    %v479 = vpop.f32.mrb[0].mxu0
    %v480 = vadd.f32 %v173, %v479
    %v481 = vpop.f32.mrb[0].mxu0
    %482 = vmatprep.mubr.f32.mxu0 0.0
    %483 = vmatmul.mubr.f32.gmra.mrb[0].mxu0 %v207
    %v484 = vpop.f32.mrb[0].mxu0
    %v485 = vadd.f32 %v173, %v484
    %v486 = vpop.f32.mrb[0].mxu0
    %487 = vmatprep.mubr.f32.mxu0 0.0
    %488 = vmatmul.mubr.f32.gmra.mrb[0].mxu0 %v210
    %v489 = vpop.f32.mrb[0].mxu0
    %v490 = vadd.f32 %v173, %v489
    %v491 = vpop.f32.mrb[0].mxu0
    %492 = vmatprep.mubr.f32.mxu0 0.0
    %493 = vmatmul.mubr.f32.gmra.mrb[0].mxu0 %v213
    %v494 = vpop.f32.mrb[0].mxu0
    %v495 = vadd.f32 %v173, %v494
    %v496 = vpop.f32.mrb[0].mxu0
    %497 = vmatprep.mubr.f32.mxu0 0.0
    %498 = vmatmul.mubr.f32.gmra.mrb[0].mxu0 %v216
    %v499 = vpop.f32.mrb[0].mxu0
    %v500 = vadd.f32 %v173, %v499
    %v501 = vpop.f32.mrb[0].mxu0
    %502 = vmatprep.mubr.f32.mxu0 0.0
    %503 = vmatmul.mubr.f32.gmra.mrb[0].mxu0 %v219
    %v504 = vpop.f32.mrb[0].mxu0
    %v505 = vadd.f32 %v173, %v504
    %v506 = vpop.f32.mrb[0].mxu0
    %507 = vmatprep.mubr.f32.mxu0 0.0
    %508 = vmatmul.mubr.f32.gmra.mrb[0].mxu0 %v222
    %v509 = vpop.f32.mrb[0].mxu0
    %v510 = vadd.f32 %v173, %v509
    %v511 = vpop.f32.mrb[0].mxu0
    %512 = vmatprep.mubr.f32.mxu0 0.0
    %513 = vmatmul.mubr.f32.gmra.mrb[0].mxu0 %v225
    %v514 = vpop.f32.mrb[0].mxu0
    %v515 = vadd.f32 %v173, %v514
    %v516 = vpop.f32.mrb[0].mxu0
    %517 = vmatprep.mubr.f32.mxu0 0.0
    %518 = vmatmul.mubr.f32.gmra.mrb[0].mxu0 %v228
    %v519 = vpop.f32.mrb[0].mxu0
    %v520 = vadd.f32 %v173, %v519
    %v521 = vpop.f32.mrb[0].mxu0
    %522 = vmatprep.mubr.f32.mxu0 0.0
    %523 = vmatmul.mubr.f32.gmra.mrb[0].mxu0 %v231
    %v524 = vpop.f32.mrb[0].mxu0
    %v525 = vadd.f32 %v173, %v524
    %v526 = vpop.f32.mrb[0].mxu0
    %527 = vmatprep.mubr.f32.mxu0 0.0
    %528 = vmatmul.mubr.f32.gmra.mrb[0].mxu0 %v234
    %v529 = vpop.f32.mrb[0].mxu0
    %v530 = vadd.f32 %v173, %v529
    %v531 = vpop.f32.mrb[0].mxu0
    %532 = vmatprep.mubr.f32.mxu0 0.0
    %533 = vmatmul.mubr.f32.gmra.mrb[0].mxu0 %v237
    %v534 = vpop.f32.mrb[0].mxu0
    %v535 = vadd.f32 %v173, %v534
    %v536 = vpop.f32.mrb[0].mxu0
    %537 = vmatprep.mubr.f32.mxu0 0.0
    %538 = vmatmul.mubr.f32.gmra.mrb[0].mxu0 %v240
    %v539 = vpop.f32.mrb[0].mxu0
    %v540 = vadd.f32 %v173, %v539
    %v541 = vpop.f32.mrb[0].mxu0
    %542 = vmatprep.mubr.f32.mxu0 0.0
    %543 = vmatmul.mubr.f32.gmra.mrb[0].mxu0 %v243
    %v544 = vpop.f32.mrb[0].mxu0
    %v545 = vadd.f32 %v173, %v544
    %v546 = vpop.f32.mrb[0].mxu0
    %547 = vmatprep.mubr.f32.mxu0 0.0
    %548 = vmatmul.mubr.f32.gmra.mrb[0].mxu0 %v246
    %v549 = vpop.f32.mrb[0].mxu0
    %v550 = vadd.f32 %v173, %v549
    %v551 = vpop.f32.mrb[0].mxu0
    %552 = vmatprep.mubr.f32.mxu0 0.0
    %553 = vmatmul.mubr.f32.gmra.mrb[0].mxu0 %v249
    %v554 = vpop.f32.mrb[0].mxu0
    %v555 = vadd.f32 %v173, %v554
    %v556 = vpop.f32.mrb[0].mxu0
    %557 = vmatprep.mubr.f32.mxu0 0.0
    %558 = vmatmul.mubr.f32.gmra.mrb[0].mxu0 %v252
    %v559 = vpop.f32.mrb[0].mxu0
    %v560 = vadd.f32 %v173, %v559
    %v561 = vpop.f32.mrb[0].mxu0
    %562 = vmatprep.mubr.f32.mxu0 0.0
    %563 = vmatmul.mubr.f32.gmra.mrb[0].mxu0 %v255
    %v564 = vpop.f32.mrb[0].mxu0
    %v565 = vadd.f32 %v173, %v564
    %v566 = vpop.f32.mrb[0].mxu0
    %567 = vmatprep.mubr.f32.mxu0 0.0
    %568 = vmatmul.mubr.f32.gmra.mrb[0].mxu0 %v258
    %v569 = vpop.f32.mrb[0].mxu0
    %v570 = vadd.f32 %v173, %v569
    %v571 = vpop.f32.mrb[0].mxu0
    %572 = vmatprep.mubr.f32.mxu0 0.0
    %573 = vmatmul.mubr.f32.gmra.mrb[0].mxu0 %v261
    %v574 = vpop.f32.mrb[0].mxu0
    %v575 = vadd.f32 %v173, %v574
    %v576 = vpop.f32.mrb[0].mxu0
    %577 = vmatprep.mubr.f32.mxu0 0.0
    %578 = vmatmul.mubr.f32.gmra.mrb[0].mxu0 %v264
    %v579 = vpop.f32.mrb[0].mxu0
    %v580 = vadd.f32 %v173, %v579
    %v581 = vpop.f32.mrb[0].mxu0
    %582 = vmatprep.mubr.f32.mxu0 0.0
    %583 = vmatmul.mubr.f32.gmra.mrb[0].mxu0 %v267
    %v584 = vpop.f32.mrb[0].mxu0
    %v585 = vadd.f32 %v173, %v584
    %v586 = vpop.f32.mrb[0].mxu0
    %587 = vmatprep.mubr.f32.mxu0 0.0
    %588 = vmatmul.mubr.f32.gmra.mrb[0].mxu0 %v270
    %v589 = vpop.f32.mrb[0].mxu0
    %v590 = vadd.f32 %v173, %v589
    %v591 = vpop.f32.mrb[0].mxu0
    %592 = vmatprep.mubr.f32.mxu0 0.0
    %593 = vmatmul.mubr.f32.gmra.mrb[0].mxu0 %v273
    %v594 = vpop.f32.mrb[0].mxu0
    %v595 = vadd.f32 %v173, %v594
    %v596 = vpop.f32.mrb[0].mxu0
    %597 = vmatprep.mubr.f32.mxu0 0.0
    %598 = vmatmul.mubr.f32.gmra.mrb[0].mxu0 %v276
    %v599 = vpop.f32.mrb[0].mxu0
    %v600 = vadd.f32 %v173, %v599
    %v601 = vpop.f32.mrb[0].mxu0
    %602 = vmatprep.mubr.f32.mxu0 0.0
    %603 = vmatmul.mubr.f32.gmra.mrb[0].mxu0 %v279
    %v604 = vpop.f32.mrb[0].mxu0
    %v605 = vadd.f32 %v173, %v604
    %v606 = vpop.f32.mrb[0].mxu0
    %607 = vmatprep.mubr.f32.mxu0 0.0
    %608 = vmatmul.mubr.f32.gmra.mrb[0].mxu0 %v282
    %v609 = vpop.f32.mrb[0].mxu0
    %v610 = vadd.f32 %v173, %v609
    %v611 = vpop.f32.mrb[0].mxu0
    %612 = vmatprep.mubr.f32.mxu0 0.0
    %613 = vmatmul.mubr.f32.gmra.mrb[0].mxu0 %v285
    %v614 = vpop.f32.mrb[0].mxu0
    %v615 = vadd.f32 %v173, %v614
    %v616 = vpop.f32.mrb[0].mxu0
    %617 = vmatprep.mubr.f32.mxu0 0.0
    %618 = vmatmul.mubr.f32.gmra.mrb[0].mxu0 %v288
    %v619 = vpop.f32.mrb[0].mxu0
    %v620 = vadd.f32 %v173, %v619
    %v621 = vpop.f32.mrb[0].mxu0
    %622 = vmatprep.mubr.f32.mxu0 0.0
    %623 = vmatmul.mubr.f32.gmra.mrb[0].mxu0 %v291
    %v624 = vpop.f32.mrb[0].mxu0
    %v625 = vadd.f32 %v173, %v624
    %v626 = vpop.f32.mrb[0].mxu0
    %627 = vmatprep.mubr.f32.mxu0 0.0
    %628 = vmatmul.mubr.f32.gmra.mrb[0].mxu0 %v294
    %v629 = vpop.f32.mrb[0].mxu0
    %v630 = vadd.f32 %v173, %v629
    %v631 = vpop.f32.mrb[0].mxu0
    %632 = vmatprep.mubr.f32.mxu0 0.0
    %633 = vmatmul.mubr.f32.gmra.mrb[0].mxu0 %v297
    %v634 = vpop.f32.mrb[0].mxu0
    %v635 = vadd.f32 %v173, %v634
    %v636 = vpop.f32.mrb[0].mxu0
    %637 = vmatprep.mubr.f32.mxu0 0.0
    %638 = vmatmul.mubr.f32.gmra.mrb[0].mxu0 %v300
    %v639 = vpop.f32.mrb[0].mxu0
    %v640 = vadd.f32 %v173, %v639
    %v641 = vpop.f32.mrb[0].mxu0
    %642 = vmatprep.mubr.f32.mxu0 0.0
    %643 = vmatmul.mubr.f32.gmra.mrb[0].mxu0 %v303
    %v644 = vpop.f32.mrb[0].mxu0
    %v645 = vadd.f32 %v173, %v644
    %v646 = vpop.f32.mrb[0].mxu0
    %647 = vmatprep.mubr.f32.mxu0 0.0
    %648 = vmatmul.mubr.f32.gmra.mrb[0].mxu0 %v306
    %v649 = vpop.f32.mrb[0].mxu0
    %v650 = vadd.f32 %v173, %v649
    %v651 = vpop.f32.mrb[0].mxu0
    %652 = vmatprep.mubr.f32.mxu0 0.0
    %653 = vmatmul.mubr.f32.gmra.mrb[0].mxu0 %v309
    %v654 = vpop.f32.mrb[0].mxu0
    %v655 = vadd.f32 %v173, %v654
    %v656 = vpop.f32.mrb[0].mxu0
    %657 = vmatprep.mubr.f32.mxu0 0.0
    %658 = vmatmul.mubr.f32.gmra.mrb[0].mxu0 %v312
    %v659 = vpop.f32.mrb[0].mxu0
    %v660 = vadd.f32 %v173, %v659
    %v661 = vpop.f32.mrb[0].mxu0
    %662 = vmatprep.mubr.f32.mxu0 0.0
    %663 = vmatmul.mubr.f32.gmra.mrb[0].mxu0 %v315
    %v664 = vpop.f32.mrb[0].mxu0
    %v665 = vadd.f32 %v173, %v664
    %v666 = vpop.f32.mrb[0].mxu0
    %667 = vmatprep.mubr.f32.mxu0 0.0
    %668 = vmatmul.mubr.f32.gmra.mrb[0].mxu0 %v318
    %v669 = vpop.f32.mrb[0].mxu0
    %v670 = vadd.f32 %v173, %v669
    %v671 = vpop.f32.mrb[0].mxu0
    %672 = vmatprep.mubr.f32.mxu0 0.0
    %673 = vmatmul.mubr.f32.gmra.mrb[0].mxu0 %v321
    %v674 = vpop.f32.mrb[0].mxu0
    %v675 = vadd.f32 %v173, %v674
    %v676 = vpop.f32.mrb[0].mxu0
    %677 = vmatprep.mubr.f32.mxu0 0.0
    %678 = vmatmul.mubr.f32.gmra.mrb[0].mxu0 %v324
    %v679 = vpop.f32.mrb[0].mxu0
    %v680 = vadd.f32 %v173, %v679
    %v681 = vpop.f32.mrb[0].mxu0
    %682 = vmatprep.mubr.f32.mxu0 0.0
    %683 = vmatmul.mubr.f32.gmra.mrb[0].mxu0 %v327
    %v684 = vpop.f32.mrb[0].mxu0
    %v685 = vadd.f32 %v173, %v684
    %v686 = vpop.f32.mrb[0].mxu0
    %687 = vmatprep.mubr.f32.mxu0 0.0
    %688 = vmatmul.mubr.f32.gmra.mrb[0].mxu0 %v330
    %v689 = vpop.f32.mrb[0].mxu0
    %v690 = vadd.f32 %v173, %v689
    %v691 = vpop.f32.mrb[0].mxu0
    %692 = vmatprep.mubr.f32.mxu0 0.0
    %693 = vmatmul.mubr.f32.gmra.mrb[0].mxu0 %v333
    %v694 = vpop.f32.mrb[0].mxu0
    %v695 = vadd.f32 %v173, %v694
    %v696 = vpop.f32.mrb[0].mxu0
    %697 = vmatprep.mubr.f32.mxu0 0.0
    %698 = vmatmul.mubr.f32.gmra.mrb[0].mxu0 %v336
    %v699 = vpop.f32.mrb[0].mxu0
    %v700 = vadd.f32 %v173, %v699
    %v701 = vpop.f32.mrb[0].mxu0
    %702 = vmatprep.mubr.f32.mxu0 0.0
    %703 = vmatmul.mubr.f32.gmra.mrb[0].mxu0 %v339
    %v704 = vpop.f32.mrb[0].mxu0
    %v705 = vadd.f32 %v173, %v704
    %v706 = vpop.f32.mrb[0].mxu0
    %707 = vmatprep.mubr.f32.mxu0 0.0
    %708 = vmatmul.mubr.f32.gmra.mrb[0].mxu0 %v342
    %v709 = vpop.f32.mrb[0].mxu0
    %v710 = vadd.f32 %v173, %v709
    %v711 = vpop.f32.mrb[0].mxu0
    %712 = vmatprep.mubr.f32.mxu0 0.0
    %713 = vmatmul.mubr.f32.gmra.mrb[0].mxu0 %v345
    %v714 = vpop.f32.mrb[0].mxu0
    %v715 = vadd.f32 %v173, %v714
    %v716 = vpop.f32.mrb[0].mxu0
    %717 = vmatprep.mubr.f32.mxu0 0.0
    %718 = vmatmul.mubr.f32.gmra.mrb[0].mxu0 %v348
    %v719 = vpop.f32.mrb[0].mxu0
    %v720 = vadd.f32 %v173, %v719
    %v721 = vpop.f32.mrb[0].mxu0
    %722 = vmatprep.mubr.f32.mxu0 0.0
    %723 = vmatmul.mubr.f32.gmra.mrb[0].mxu0 %v351
    %v724 = vpop.f32.mrb[0].mxu0
    %v725 = vadd.f32 %v173, %v724
    %v726 = vpop.f32.mrb[0].mxu0
    %727 = vmatprep.mubr.f32.mxu0 0.0
    %728 = vmatmul.mubr.f32.gmra.mrb[0].mxu0 %v354
    %v729 = vpop.f32.mrb[0].mxu0
    %v730 = vadd.f32 %v173, %v729
    %v731 = vpop.f32.mrb[0].mxu0
    %732 = vmatprep.mubr.f32.mxu0 0.0
    %733 = vmatmul.mubr.f32.gmra.mrb[0].mxu0 %v357
    %v734 = vpop.f32.mrb[0].mxu0
    %v735 = vadd.f32 %v173, %v734
    %v736 = vpop.f32.mrb[0].mxu0
    %737 = vmatprep.mubr.f32.mxu0 0.0
    %738 = vmatmul.mubr.f32.gmra.mrb[0].mxu0 %v360
    %v739 = vpop.f32.mrb[0].mxu0
    %v740 = vadd.f32 %v173, %v739
    %v741 = vpop.f32.mrb[0].mxu0
    %742 = vmatprep.mubr.f32.mxu0 0.0
    %743 = vmatmul.mubr.f32.gmra.mrb[0].mxu0 %v363
    %v744 = vpop.f32.mrb[0].mxu0
    %v745 = vadd.f32 %v173, %v744
    %v746 = vpop.f32.mrb[0].mxu0
    %747 = vmatprep.mubr.f32.mxu0 0.0
    %748 = vmatmul.mubr.f32.gmra.mrb[0].mxu0 %v366
    %v749 = vpop.f32.mrb[0].mxu0
    %v750 = vadd.f32 %v173, %v749
    %v751 = vpop.f32.mrb[0].mxu0
    %752 = vdwg.mxu0
    %v753 = vmax.f32 %v435, 0.0
    %v754 = vmax.f32 %v440, 0.0
    %v755 = vmax.f32 %v445, 0.0
    %v756 = vmax.f32 %v450, 0.0
    %v757 = vmax.f32 %v455, 0.0
    %v758 = vmax.f32 %v460, 0.0
    %v759 = vmax.f32 %v465, 0.0
    %v760 = vmax.f32 %v470, 0.0
    %v761 = vmax.f32 %v475, 0.0
    %v762 = vmax.f32 %v480, 0.0
    %v763 = vmax.f32 %v485, 0.0
    %v764 = vmax.f32 %v490, 0.0
    %v765 = vmax.f32 %v495, 0.0
    %v766 = vmax.f32 %v500, 0.0
    %v767 = vmax.f32 %v505, 0.0
    %v768 = vmax.f32 %v510, 0.0
    %v769 = vmax.f32 %v515, 0.0
    %v770 = vmax.f32 %v520, 0.0
    %v771 = vmax.f32 %v525, 0.0
    %v772 = vmax.f32 %v530, 0.0
    %v773 = vmax.f32 %v535, 0.0
    %v774 = vmax.f32 %v540, 0.0
    %v775 = vmax.f32 %v545, 0.0
    %v776 = vmax.f32 %v550, 0.0
    %v777 = vmax.f32 %v555, 0.0
    %v778 = vmax.f32 %v560, 0.0
    %v779 = vmax.f32 %v565, 0.0
    %v780 = vmax.f32 %v570, 0.0
    %v781 = vmax.f32 %v575, 0.0
    %v782 = vmax.f32 %v580, 0.0
    %v783 = vmax.f32 %v585, 0.0
    %v784 = vmax.f32 %v590, 0.0
    %v785 = vmax.f32 %v595, 0.0
    %v786 = vmax.f32 %v600, 0.0
    %v787 = vmax.f32 %v605, 0.0
    %v788 = vmax.f32 %v610, 0.0
    %v789 = vmax.f32 %v615, 0.0
    %v790 = vmax.f32 %v620, 0.0
    %v791 = vmax.f32 %v625, 0.0
    %v792 = vmax.f32 %v630, 0.0
    %v793 = vmax.f32 %v635, 0.0
    %v794 = vmax.f32 %v640, 0.0
    %v795 = vmax.f32 %v645, 0.0
    %v796 = vmax.f32 %v650, 0.0
    %v797 = vmax.f32 %v655, 0.0
    %v798 = vmax.f32 %v660, 0.0
    %v799 = vmax.f32 %v665, 0.0
    %v800 = vmax.f32 %v670, 0.0
    %v801 = vmax.f32 %v675, 0.0
    %v802 = vmax.f32 %v680, 0.0
    %v803 = vmax.f32 %v685, 0.0
    %v804 = vmax.f32 %v690, 0.0
    %v805 = vmax.f32 %v695, 0.0
    %v806 = vmax.f32 %v700, 0.0
    %v807 = vmax.f32 %v705, 0.0
    %v808 = vmax.f32 %v710, 0.0
    %v809 = vmax.f32 %v715, 0.0
    %v810 = vmax.f32 %v720, 0.0
    %v811 = vmax.f32 %v725, 0.0
    %v812 = vmax.f32 %v730, 0.0
    %v813 = vmax.f32 %v735, 0.0
    %v814 = vmax.f32 %v740, 0.0
    %v815 = vmax.f32 %v745, 0.0
    %v816 = vmax.f32 %v750, 0.0
    %v817 = vld [vmem:[#allocation8] sm:$0xff]
    %v819 = vcombine.high %v817, %v817
    %v821 = vunpack.c.l.s4 1983009808
    %v822 = vunpack.c.0.s8 %v821
    %v823 = vlaneseq
    %v824 = vshrl.u32 %v823, 7
    %v825 = vsub.s32 %v822, %v824
    %v826 = vrot.slane %v817, %v825
    %v828 = vunpack.c.l.s4 1983009808
    %v829 = vunpack.c.0.s8 %v828
    %v830 = vlaneseq
    %v831 = vshrl.u32 %v830, 7
    %v832 = vsub.s32 %v829, %v831
    %v833 = vrot.slane %v819, %v832
    %v834 = vcombine.high %v826, %v826
    %v835 = vcombine.high %v833, %v833
    %840 = vmatprep.subr.mxu0 0.0
    %841 = vmatpush1.msra.mxu0 %v753
    %842 = vmatprep.subr.mxu0 0.0
    %843 = vmatpush1.msra.mxu0 %v754
    %844 = vmatprep.subr.mxu0 0.0
    %845 = vmatpush1.msra.mxu0 %v755
    %846 = vmatprep.subr.mxu0 0.0
    %847 = vmatpush1.msra.mxu0 %v756
    %848 = vmatprep.subr.mxu0 0.0
    %849 = vmatpush1.msra.mxu0 %v757
    %850 = vmatprep.subr.mxu0 0.0
    %851 = vmatpush1.msra.mxu0 %v758
    %852 = vmatprep.subr.mxu0 0.0
    %853 = vmatpush1.msra.mxu0 %v759
    %854 = vmatprep.subr.mxu0 0.0
    %855 = vmatpush1.msra.mxu0 %v760
    %856 = vmatprep.subr.mxu0 0.0
    %857 = vmatpush1.msra.mxu0 %v761
    %858 = vmatprep.subr.mxu0 0.0
    %859 = vmatpush1.msra.mxu0 %v762
    %860 = vmatprep.subr.mxu0 0.0
    %861 = vmatpush1.msra.mxu0 %v763
    %862 = vmatprep.subr.mxu0 0.0
    %863 = vmatpush1.msra.mxu0 %v764
    %864 = vmatprep.subr.mxu0 0.0
    %865 = vmatpush1.msra.mxu0 %v765
    %866 = vmatprep.subr.mxu0 0.0
    %867 = vmatpush1.msra.mxu0 %v766
    %868 = vmatprep.subr.mxu0 0.0
    %869 = vmatpush1.msra.mxu0 %v767
    %870 = vmatprep.subr.mxu0 0.0
    %871 = vmatpush1.msra.mxu0 %v768
    %872 = vmatprep.subr.mxu0 0.0
    %873 = vmatpush1.msra.mxu0 %v769
    %874 = vmatprep.subr.mxu0 0.0
    %875 = vmatpush1.msra.mxu0 %v770
    %876 = vmatprep.subr.mxu0 0.0
    %877 = vmatpush1.msra.mxu0 %v771
    %878 = vmatprep.subr.mxu0 0.0
    %879 = vmatpush1.msra.mxu0 %v772
    %880 = vmatprep.subr.mxu0 0.0
    %881 = vmatpush1.msra.mxu0 %v773
    %882 = vmatprep.subr.mxu0 0.0
    %883 = vmatpush1.msra.mxu0 %v774
    %884 = vmatprep.subr.mxu0 0.0
    %885 = vmatpush1.msra.mxu0 %v775
    %886 = vmatprep.subr.mxu0 0.0
    %887 = vmatpush1.msra.mxu0 %v776
    %888 = vmatprep.subr.mxu0 0.0
    %889 = vmatpush1.msra.mxu0 %v777
    %890 = vmatprep.subr.mxu0 0.0
    %891 = vmatpush1.msra.mxu0 %v778
    %892 = vmatprep.subr.mxu0 0.0
    %893 = vmatpush1.msra.mxu0 %v779
    %894 = vmatprep.subr.mxu0 0.0
    %895 = vmatpush1.msra.mxu0 %v780
    %896 = vmatprep.subr.mxu0 0.0
    %897 = vmatpush1.msra.mxu0 %v781
    %898 = vmatprep.subr.mxu0 0.0
    %899 = vmatpush1.msra.mxu0 %v782
    %900 = vmatprep.subr.mxu0 0.0
    %901 = vmatpush1.msra.mxu0 %v783
    %902 = vmatprep.subr.mxu0 0.0
    %903 = vmatpush1.msra.mxu0 %v784
    %904 = vmatprep.mubr.f32.mxu0 %v834
    %905 = vmatmul.mubr.f32.gmra.mrb[0].mxu0 %v826
    %v906 = vpop.f32.mrb[0].mxu0
    %v907 = vadd.f32 0.0, %v906
    %v908 = vpop.f32.mrb[0].mxu0
    %909 = vdwg.mxu0
    %910 = vmatprep.subr.mxu0 0.0
    %911 = vmatpush1.msra.mxu0 %v785
    %912 = vmatprep.subr.mxu0 0.0
    %913 = vmatpush1.msra.mxu0 %v786
    %914 = vmatprep.subr.mxu0 0.0
    %915 = vmatpush1.msra.mxu0 %v787
    %916 = vmatprep.subr.mxu0 0.0
    %917 = vmatpush1.msra.mxu0 %v788
    %918 = vmatprep.subr.mxu0 0.0
    %919 = vmatpush1.msra.mxu0 %v789
    %920 = vmatprep.subr.mxu0 0.0
    %921 = vmatpush1.msra.mxu0 %v790
    %922 = vmatprep.subr.mxu0 0.0
    %923 = vmatpush1.msra.mxu0 %v791
    %924 = vmatprep.subr.mxu0 0.0
    %925 = vmatpush1.msra.mxu0 %v792
    %926 = vmatprep.subr.mxu0 0.0
    %927 = vmatpush1.msra.mxu0 %v793
    %928 = vmatprep.subr.mxu0 0.0
    %929 = vmatpush1.msra.mxu0 %v794
    %930 = vmatprep.subr.mxu0 0.0
    %931 = vmatpush1.msra.mxu0 %v795
    %932 = vmatprep.subr.mxu0 0.0
    %933 = vmatpush1.msra.mxu0 %v796
    %934 = vmatprep.subr.mxu0 0.0
    %935 = vmatpush1.msra.mxu0 %v797
    %936 = vmatprep.subr.mxu0 0.0
    %937 = vmatpush1.msra.mxu0 %v798
    %938 = vmatprep.subr.mxu0 0.0
    %939 = vmatpush1.msra.mxu0 %v799
    %940 = vmatprep.subr.mxu0 0.0
    %941 = vmatpush1.msra.mxu0 %v800
    %942 = vmatprep.subr.mxu0 0.0
    %943 = vmatpush1.msra.mxu0 %v801
    %944 = vmatprep.subr.mxu0 0.0
    %945 = vmatpush1.msra.mxu0 %v802
    %946 = vmatprep.subr.mxu0 0.0
    %947 = vmatpush1.msra.mxu0 %v803
    %948 = vmatprep.subr.mxu0 0.0
    %949 = vmatpush1.msra.mxu0 %v804
    %950 = vmatprep.subr.mxu0 0.0
    %951 = vmatpush1.msra.mxu0 %v805
    %952 = vmatprep.subr.mxu0 0.0
    %953 = vmatpush1.msra.mxu0 %v806
    %954 = vmatprep.subr.mxu0 0.0
    %955 = vmatpush1.msra.mxu0 %v807
    %956 = vmatprep.subr.mxu0 0.0
    %957 = vmatpush1.msra.mxu0 %v808
    %958 = vmatprep.subr.mxu0 0.0
    %959 = vmatpush1.msra.mxu0 %v809
    %960 = vmatprep.subr.mxu0 0.0
    %961 = vmatpush1.msra.mxu0 %v810
    %962 = vmatprep.subr.mxu0 0.0
    %963 = vmatpush1.msra.mxu0 %v811
    %964 = vmatprep.subr.mxu0 0.0
    %965 = vmatpush1.msra.mxu0 %v812
    %966 = vmatprep.subr.mxu0 0.0
    %967 = vmatpush1.msra.mxu0 %v813
    %968 = vmatprep.subr.mxu0 0.0
    %969 = vmatpush1.msra.mxu0 %v814
    %970 = vmatprep.subr.mxu0 0.0
    %971 = vmatpush1.msra.mxu0 %v815
    %972 = vmatprep.subr.mxu0 0.0
    %973 = vmatpush1.msra.mxu0 %v816
    %974 = vmatprep.mubr.f32.mxu0 %v835
    %975 = vmatmul.mubr.f32.gmra.mrb[0].mxu0 %v833
    %v976 = vpop.f32.mrb[0].mxu0
    %v977 = vadd.f32 %v907, %v976
    %v978 = vpop.f32.mrb[0].mxu0
    %979 = vdwg.mxu0
    %v980 = vld [vmem:[#allocation10] sm:$0xff]
    %v981 = vld [vmem:[#allocation10 + $0x8] sm:$0xff]
    %v982 = vld [vmem:[#allocation10 + $0x10] sm:$0xff]
    %v983 = vld [vmem:[#allocation10 + $0x18] sm:$0xff]
    %v984 = vld [vmem:[#allocation10 + $0x20] sm:$0xff]
    %v985 = vld [vmem:[#allocation10 + $0x28] sm:$0xff]
    %v986 = vld [vmem:[#allocation10 + $0x30] sm:$0xff]
    %v987 = vld [vmem:[#allocation10 + $0x38] sm:$0xff]
    %v988 = vld [vmem:[#allocation10 + $0x40] sm:$0xff]
    %v989 = vld [vmem:[#allocation10 + $0x48] sm:$0xff]
    %v990 = vld [vmem:[#allocation10 + $0x50] sm:$0xff]
    %v991 = vld [vmem:[#allocation10 + $0x58] sm:$0xff]
    %v992 = vld [vmem:[#allocation10 + $0x60] sm:$0xff]
    %v993 = vld [vmem:[#allocation10 + $0x68] sm:$0xff]
    %v994 = vld [vmem:[#allocation10 + $0x70] sm:$0xff]
    %v995 = vld [vmem:[#allocation10 + $0x78] sm:$0xff]
    %v996 = vld [vmem:[#allocation11] sm:$0x1]
    %v998 = vlaneseq
    %v999 = vshrl.u32 %v998, 7
    %v1000 = vsub.s32 0, %v999
    %v1001 = vrot.slane %v996, %v1000
    %1003 = vmatprep.subr.mxu0 0.0
    %1004 = vmatpush1.msra.mxu0 %v980
    %1005 = vmatprep.subr.mxu0 0.0
    %1006 = vmatpush1.msra.mxu0 %v981
    %1007 = vmatprep.subr.mxu0 0.0
    %1008 = vmatpush1.msra.mxu0 %v982
    %1009 = vmatprep.subr.mxu0 0.0
    %1010 = vmatpush1.msra.mxu0 %v983
    %1011 = vmatprep.subr.mxu0 0.0
    %1012 = vmatpush1.msra.mxu0 %v984
    %1013 = vmatprep.subr.mxu0 0.0
    %1014 = vmatpush1.msra.mxu0 %v985
    %1015 = vmatprep.subr.mxu0 0.0
    %1016 = vmatpush1.msra.mxu0 %v986
    %1017 = vmatprep.subr.mxu0 0.0
    %1018 = vmatpush1.msra.mxu0 %v987
    %1019 = vmatprep.subr.mxu0 0.0
    %1020 = vmatpush1.msra.mxu0 %v988
    %1021 = vmatprep.subr.mxu0 0.0
    %1022 = vmatpush1.msra.mxu0 %v989
    %1023 = vmatprep.subr.mxu0 0.0
    %1024 = vmatpush1.msra.mxu0 %v990
    %1025 = vmatprep.subr.mxu0 0.0
    %1026 = vmatpush1.msra.mxu0 %v991
    %1027 = vmatprep.subr.mxu0 0.0
    %1028 = vmatpush1.msra.mxu0 %v992
    %1029 = vmatprep.subr.mxu0 0.0
    %1030 = vmatpush1.msra.mxu0 %v993
    %1031 = vmatprep.subr.mxu0 0.0
    %1032 = vmatpush1.msra.mxu0 %v994
    %1033 = vmatprep.subr.mxu0 0.0
    %1034 = vmatpush1.msra.mxu0 %v995
    %1035 = vmatprep.subr.mxu0 0.0
    %1036 = vmatpush1.msra.mxu0 0.0
    %1037 = vmatprep.subr.mxu0 0.0
    %1038 = vmatpush1.msra.mxu0 0.0
    %1039 = vmatprep.subr.mxu0 0.0
    %1040 = vmatpush1.msra.mxu0 0.0
    %1041 = vmatprep.subr.mxu0 0.0
    %1042 = vmatpush1.msra.mxu0 0.0
    %1043 = vmatprep.subr.mxu0 0.0
    %1044 = vmatpush1.msra.mxu0 0.0
    %1045 = vmatprep.subr.mxu0 0.0
    %1046 = vmatpush1.msra.mxu0 0.0
    %1047 = vmatprep.subr.mxu0 0.0
    %1048 = vmatpush1.msra.mxu0 0.0
    %1049 = vmatprep.subr.mxu0 0.0
    %1050 = vmatpush1.msra.mxu0 0.0
    %1051 = vmatprep.subr.mxu0 0.0
    %1052 = vmatpush1.msra.mxu0 0.0
    %1053 = vmatprep.subr.mxu0 0.0
    %1054 = vmatpush1.msra.mxu0 0.0
    %1055 = vmatprep.subr.mxu0 0.0
    %1056 = vmatpush1.msra.mxu0 0.0
    %1057 = vmatprep.subr.mxu0 0.0
    %1058 = vmatpush1.msra.mxu0 0.0
    %1059 = vmatprep.subr.mxu0 0.0
    %1060 = vmatpush1.msra.mxu0 0.0
    %1061 = vmatprep.subr.mxu0 0.0
    %1062 = vmatpush1.msra.mxu0 0.0
    %1063 = vmatprep.subr.mxu0 0.0
    %1064 = vmatpush1.msra.mxu0 0.0
    %1065 = vmatprep.subr.mxu0 0.0
    %1066 = vmatpush1.msra.mxu0 0.0
    %1067 = vmatprep.mubr.f32.mxu0 0.0
    %1068 = vmatmul.mubr.f32.gmra.mrb[0].mxu0 %v977
    %v1069 = vpop.f32.mrb[0].mxu0
    %v1070 = vadd.f32 %v1001, %v1069
    %v1071 = vpop.f32.mrb[0].mxu0
    %1072 = vdwg.mxu0
    %1073 = vst [vmem:[#allocation13] sm:$0x3] %v1070
    // Predicated region
    $region50: #{tpu_custom_call.1} parent=1 // pred_check
      _
    $region51: #{tpu_custom_call.1} parent=1 // pred_check_branch
      %1075 = sbr.rel (0) target = $region53
    $region52: #{tpu_custom_call.1} parent=1 // pred_region
      %s1077 = ssub.s32 32, 32
      %1078 = vsyncadd [#allocation4], %s1077
      %s1080 = sshll.u32 [#allocation13], 4
      %s1081 = int_to_ptr.vmem [resolvable:$true] %s1080
      %1083 = dma.vmem_to_hbm [thread:$0]  %s1081, 32, %s6, [#allocation4]
    $region53: #{tpu_custom_call.1} parent=1 // pred_fallthru
      _
    // Predicated region
    $region54: #{tpu_custom_call.1} parent=1 // pred_check
      _
    $region55: #{tpu_custom_call.1} parent=1 // pred_check_branch
      %1085 = sbr.rel (0) target = $region57
    $region56: #{tpu_custom_call.1} parent=1 // pred_region
      %1086 = dma.done [#allocation4], 32
    $region57: #{tpu_custom_call.1} parent=1 // pred_fallthru
      _
    %1087 = vsyncpa [#allocation3], 1
    %1088 = vsyncpa [#allocation6], 1
    %1089 = vsyncpa [#allocation9], 1
    %1090 = vsyncpa [#allocation12], 1
    %1091 = vsyncpa [#allocation4], 1

</llo_original>
